<compile_context>
chip_gen: v7x
topology: tpu7x:2x2x1
jax: 0.10.0
libtpu: 0.0.40
codegen_flags: <defaults>
</compile_context>

<pallas_src>
import functools

import jax
import jax.numpy as jnp
from jax.experimental import pallas as pl
from jax.experimental.pallas import tpu as pltpu

_LANE = 128


def _round_up(v, m):
    return (v + m - 1) // m * m


def _gcn_kernel(h0_ref, a_ref, wn_ref, o_ref, h_scr, acc_ref, *,
                tm, tk, a_resident, approx_recip):
    """One grid step of the fused simpleGCN forward.

    Grid = (layer l, row-tile i, contraction-tile k); layer outermost, k innermost.
      h0_ref : (tk, Cp)  tile of h0 = x @ W (only streamed while l == 0)
      a_ref  : streamed (tm, tk) tile of A[dst, src], or the whole blocked
               (num_i, num_k, tm, tk) array when A is VMEM-resident
      wn_ref : (1, Cp)   |w_for_norm| (resident, f32)
      o_ref  : (tm, Cp)  output tile for rows [i*tm, i*tm + tm)
      h_scr  : (2, Np, Cp) ping-pong buffer carrying h across layers
      acc_ref: (tm, Cp)  f32 accumulator for the K-tiled A @ h matmul
    """
    l = pl.program_id(0)
    i = pl.program_id(1)
    k = pl.program_id(2)
    num_k = pl.num_programs(2)

    slot_in = l % 2            # valid for l >= 1 (layer 0 reads h0 instead)
    slot_out = (l + 1) % 2

    # ---- accumulator init on the first contraction tile.
    @pl.when(k == 0)
    def _():
        acc_ref[...] = jnp.zeros_like(acc_ref)

    # ---- pick the A tile (resident: leading-dim dynamic index only).
    if a_resident:
        a_tile = a_ref[i, k]          # (tm, tk)
    else:
        a_tile = a_ref[...]           # (tm, tk)

    # ---- message passing as an MXU matmul: x_conv[i] += A[i, k] @ h[k].
    @pl.when(l == 0)
    def _():
        acc_ref[...] += jnp.dot(a_tile, h0_ref[...],
                                preferred_element_type=jnp.float32)

    @pl.when(l > 0)
    def _():
        h_prev = h_scr[slot_in, pl.ds(pl.multiple_of(k * tk, tk), tk), :]
        acc_ref[...] += jnp.dot(a_tile, h_prev,
                                preferred_element_type=jnp.float32)

    # ---- finalize on the last contraction tile: RiemannAgg epilogue, carry h.
    @pl.when(k == num_k - 1)
    def _():
        x_conv = acc_ref[...]
        wn = wn_ref[...]                              # (1, Cp), already |.|
        s = jnp.sum(x_conv * x_conv * wn, axis=1, keepdims=True)
        denom = jnp.sqrt(s + 0.01) + 0.01
        h_new = x_conv * pl.reciprocal(denom, approx=approx_recip)
        # type_norm == 'None' -> layers_bn[l] is the identity.
        h_scr[slot_out, pl.ds(pl.multiple_of(i * tm, tm), tm), :] = (
            h_new.astype(h_scr.dtype))
        o_ref[...] = h_new.astype(o_ref.dtype)


def simple_gcn_forward(x, weight, w_for_norm, edge_index, *, num_layers,
                       compute_dtype=jnp.bfloat16, a_resident=None):
    """Plain-JAX glue: normalized dense adjacency, padding, pallas_call."""
    assert num_layers >= 1
    n, f = x.shape
    c = weight.shape[1]

    # --- graph preprocessing (the PyTorch module caches this as norm_weight) --
    # TODO(synk): dense build is O(N^2) HBM; switch to CSR gather/segment-sum
    # (PrefetchScalarGridSpec over edge_index) when E << N^2.
    row, col = edge_index[0], edge_index[1]
    deg = jnp.zeros((n,), jnp.float32).at[row].add(1.0)
    deg_inv_sqrt = jnp.where(deg > 0, deg ** -0.5, 0.0)
    norm = deg_inv_sqrt[row] * deg_inv_sqrt[col]                   # (E,)
    adj = jnp.zeros((n, n), jnp.float32).at[col, row].add(norm)    # A[dst, src]

    # --- layer-0 bootstrap hoisted out of the kernel (dropout=identity, eval) -
    h0 = x.astype(jnp.float32) @ weight.astype(jnp.float32)

    # --- pad to lane-dense / MXU-friendly shapes ------------------------------
    cp = _round_up(c, _LANE)
    tile = 512
    if n <= tile:
        np_ = _round_up(n, _LANE)
        tm = tk = np_
    else:
        tm = tk = tile
        np_ = _round_up(n, tile)
    num_i = np_ // tm
    num_k = np_ // tk

    csz = jnp.dtype(compute_dtype).itemsize
    h0p = (jnp.zeros((np_, cp), jnp.float32).at[:n, :c].set(h0)
           .astype(compute_dtype))
    wnp = jnp.zeros((1, cp), jnp.float32).at[:, :c].set(
        jnp.abs(w_for_norm.astype(jnp.float32)))
    ap = (jnp.zeros((np_, np_), jnp.float32).at[:n, :n].set(adj)
          .astype(compute_dtype))
    # TODO(synk): fp8 (e4m3) A on v7x once the accuracy budget is validated.

    # --- per-generation VMEM budget -------------------------------------------
    try:
        vmem_cap = int(pltpu.get_tpu_info().vmem_capacity_bytes)
    except Exception:  # pragma: no cover - conservative fallback
        vmem_cap = 64 * 1024 * 1024          # safe floor (v7x per-core VMEM)
    budget = int(vmem_cap * 0.9)             # headroom for compiler internals

    def _vmem_needed(resident):
        return (2 * np_ * cp * csz           # h ping-pong (resident scratch)
                + tm * cp * 4                # f32 accumulator
                + 2 * tm * cp * 4            # output blocks (double buffered)
                + 2 * tk * cp * csz          # h0 tiles (double buffered)
                + 2 * 8 * cp * 4             # |w_for_norm| (sublane padded)
                + (2 * np_ * np_ * csz if resident else 3 * tm * tk * csz))

    if a_resident is None:
        a_resident = _vmem_needed(True) <= budget
    needed = _vmem_needed(a_resident)
    if needed > budget:
        # TODO(synk): fall back to HBM-carried h / smaller tiles instead.
        raise ValueError(
            f"simpleGCN kernel needs ~{needed} B VMEM, budget {budget} B")
    vmem_limit = int(min(budget, max(2 * needed, 32 * 1024 * 1024)))

    # --- specs -----------------------------------------------------------------
    def h0_index_map(l, i, k):
        # Stream h0 tiles only while processing layer 0; pin block 0 after.
        return (jnp.where(l == 0, k, 0), 0)

    kernel = functools.partial(
        _gcn_kernel, tm=tm, tk=tk, a_resident=bool(a_resident),
        approx_recip=(jnp.dtype(compute_dtype) != jnp.dtype(jnp.float32)))

    def _run(a_spec, a_arg):
        grid_spec = pltpu.PrefetchScalarGridSpec(
            num_scalar_prefetch=0,
            grid=(num_layers, num_i, num_k),
            in_specs=[
                pl.BlockSpec((tk, cp), h0_index_map),              # h0
                a_spec,                                            # A
                pl.BlockSpec((1, cp), lambda l, i, k: (0, 0)),     # |w_for_norm|
            ],
            out_specs=pl.BlockSpec((tm, cp), lambda l, i, k: (i, 0)),
            scratch_shapes=[
                pltpu.VMEM((2, np_, cp), compute_dtype),   # h ping-pong
                pltpu.VMEM((tm, cp), jnp.float32),         # K-tile accumulator
            ],
        )
        out = pl.pallas_call(
            kernel,
            out_shape=jax.ShapeDtypeStruct((np_, cp), jnp.float32),
            grid_spec=grid_spec,
            compiler_params=pltpu.CompilerParams(
                # Layer axis carries h; all row tiles read the shared h
                # scratch, so every axis is "arbitrary".
                # TODO(synk): v7x core_parallel row split (VMEM_SHARED h).
                dimension_semantics=("arbitrary", "arbitrary", "arbitrary"),
                vmem_limit_bytes=vmem_limit,
            ),
        )(h0p, a_arg, wnp)
        return jax.block_until_ready(out)

    if a_resident:
        # Block A so the kernel only does leading-dim dynamic indexing and the
        # constant index map keeps it VMEM-resident across all layers.
        a_blocked = ap.reshape(num_i, tm, num_k, tk).transpose(0, 2, 1, 3)
        out_padded = _run(
            pl.BlockSpec((num_i, num_k, tm, tk), lambda l, i, k: (0, 0, 0, 0)),
            a_blocked)
    else:
        a_index = lambda l, i, k: (i, k)
        plain_spec = pl.BlockSpec((tm, tk), a_index)
        buffered_spec = None
        if hasattr(pl, "Buffered"):
            try:
                # Deeper A pipeline hides the row-tile-boundary epilogue bubble.
                buffered_spec = pl.BlockSpec((tm, tk), a_index,
                                             pipeline_mode=pl.Buffered(3))
            except TypeError:
                buffered_spec = None
        if buffered_spec is not None:
            try:
                out_padded = _run(buffered_spec, ap)
            except Exception:
                out_padded = _run(plain_spec, ap)
        else:
            out_padded = _run(plain_spec, ap)

    return out_padded[:n, :c]


# --------------------------------------------------------------------------- #
#                                   demo                                       #
# --------------------------------------------------------------------------- #
def _ref_forward(x, weight, w_for_norm, edge_index, num_layers):
    """Pure-JAX scatter reference matching the PyTorch forward (eval mode)."""
    n = x.shape[0]
    c = weight.shape[1]
    row, col = edge_index[0], edge_index[1]
    deg = jnp.zeros((n,), jnp.float32).at[row].add(1.0)
    dis = jnp.where(deg > 0, deg ** -0.5, 0.0)
    norm = (dis[row] * dis[col])[:, None]
    h = x @ weight
    wn = jnp.abs(w_for_norm)
    for _ in range(num_layers):
        x_j = h[row]
        x_conv = jnp.zeros((n, c), jnp.float32).at[col].add(norm * x_j)
        s = jnp.sum(x_conv * x_conv * wn, axis=1, keepdims=True)
        h = x_conv / (jnp.sqrt(s + 0.01) + 0.01)
    return h


def _make_inputs(key, n, num_feats, num_classes, e):
    k_x, k_w, k_wn, k_src, k_dst = jax.random.split(key, 5)
    x = jax.random.normal(k_x, (n, num_feats), dtype=jnp.float32)
    # glorot(weight): uniform(-s, s), s = sqrt(6 / (fan_in + fan_out))
    s = (6.0 / (num_feats + num_classes)) ** 0.5
    weight = jax.random.uniform(k_w, (num_feats, num_classes), jnp.float32,
                                minval=-s, maxval=s)
    # w_for_norm: uniform(-1/sqrt(C), 1/sqrt(C))
    stdv = 1.0 / (num_classes ** 0.5)
    w_for_norm = jax.random.uniform(k_wn, (1, num_classes), jnp.float32,
                                    minval=-stdv, maxval=stdv)
    src = jax.random.randint(k_src, (e,), 0, n, dtype=jnp.int32)
    dst = jax.random.randint(k_dst, (e,), 0, n, dtype=jnp.int32)
    edge_index = jnp.stack([src, dst], axis=0)
    return x, weight, w_for_norm, edge_index


if __name__ == "__main__":
    key = jax.random.PRNGKey(0)
    k1, k2 = jax.random.split(key)

    # --- test 1: small graph, f32 compute, tight tolerance -------------------
    N, F, C, L, E = 32, 16, 8, 2, 64
    x, w, wn, ei = _make_inputs(k1, N, F, C, E)
    out = simple_gcn_forward(x, w, wn, ei, num_layers=L,
                             compute_dtype=jnp.float32)
    out = jax.block_until_ready(out)
    ref = _ref_forward(x, w, wn, ei, L)
    assert out.shape == (N, C)
    assert jnp.allclose(out, ref, atol=1e-4, rtol=1e-4), (
        float(jnp.max(jnp.abs(out - ref))))

    # --- test 2: bigger graph, bf16 A/h, resident and streamed A paths -------
    N, F, C, L, E = 700, 16, 8, 3, 3000
    x, w, wn, ei = _make_inputs(k2, N, F, C, E)
    ref = _ref_forward(x, w, wn, ei, L)
    for resident in (True, False):
        out = simple_gcn_forward(x, w, wn, ei, num_layers=L,
                                 compute_dtype=jnp.bfloat16,
                                 a_resident=resident)
        out = jax.block_until_ready(out)
        assert out.shape == (N, C)
        # bf16 A / h carry: loose per-element tolerance + tight mean error.
        assert jnp.allclose(out, ref, atol=1e-1, rtol=1e-1), (
            resident, float(jnp.max(jnp.abs(out - ref))))
        assert float(jnp.mean(jnp.abs(out - ref))) < 1e-2, (
            resident, float(jnp.mean(jnp.abs(out - ref))))

    print("KERNEL_OK")
</pallas_src>

<mosaic_0001>
module attributes {stable_mosaic.version = 11 : i64} {
  func.func @_gcn_kernel(%arg0: i32, %arg1: i32, %arg2: i32, %arg3: memref<128x128xf32, #tpu.memory_space<vmem>>, %arg4: memref<1x1x128x128xf32, #tpu.memory_space<vmem>>, %arg5: memref<1x128xf32, #tpu.memory_space<vmem>>, %arg6: memref<128x128xf32, #tpu.memory_space<vmem>>, %arg7: memref<2x128x128xf32, #tpu.memory_space<vmem>>, %arg8: memref<128x128xf32, #tpu.memory_space<vmem>>) attributes {dimension_semantics = [#tpu.dimension_semantics<arbitrary>, #tpu.dimension_semantics<arbitrary>, #tpu.dimension_semantics<arbitrary>], iteration_bounds = array<i64: 2, 1, 1>, scalar_prefetch = 0 : i64, scratch_operands = 2 : i64, tpu.core_type = #tpu.core_type<tc>, window_params = [{transform_indices = @transform_0, window_bounds = array<i64: 128, 128>}, {pipeline_mode = #tpu.pipeline_mode<synchronous>, transform_indices = @transform_1, window_bounds = array<i64: 1, 1, 128, 128>}, {pipeline_mode = #tpu.pipeline_mode<synchronous>, transform_indices = @transform_2, window_bounds = array<i64: 1, 128>}, {transform_indices = @transform_3, window_bounds = array<i64: 128, 128>}]} {
    %c2_i32 = arith.constant 2 : i32
    %c0_i32 = arith.constant 0 : i32
    %0 = arith.cmpi eq, %c2_i32, %c0_i32 : i32
    %c1_i32 = arith.constant 1 : i32
    %1 = arith.select %0, %c1_i32, %c2_i32 : i32
    %2 = arith.remsi %arg0, %1 : i32
    %c0_i32_0 = arith.constant 0 : i32
    %3 = arith.cmpi ne, %2, %c0_i32_0 : i32
    %c0_i32_1 = arith.constant 0 : i32
    %4 = arith.cmpi slt, %2, %c0_i32_1 : i32
    %c0_i32_2 = arith.constant 0 : i32
    %5 = arith.cmpi slt, %1, %c0_i32_2 : i32
    %6 = arith.xori %4, %5 : i1
    %7 = arith.andi %6, %3 : i1
    %8 = arith.addi %2, %1 : i32
    %9 = arith.select %7, %8, %2 : i32
    %c1_i32_3 = arith.constant 1 : i32
    %10 = arith.addi %arg0, %c1_i32_3 : i32
    %c2_i32_4 = arith.constant 2 : i32
    %c0_i32_5 = arith.constant 0 : i32
    %11 = arith.cmpi eq, %c2_i32_4, %c0_i32_5 : i32
    %c1_i32_6 = arith.constant 1 : i32
    %12 = arith.select %11, %c1_i32_6, %c2_i32_4 : i32
    %13 = arith.remsi %10, %12 : i32
    %c0_i32_7 = arith.constant 0 : i32
    %14 = arith.cmpi ne, %13, %c0_i32_7 : i32
    %c0_i32_8 = arith.constant 0 : i32
    %15 = arith.cmpi slt, %13, %c0_i32_8 : i32
    %c0_i32_9 = arith.constant 0 : i32
    %16 = arith.cmpi slt, %12, %c0_i32_9 : i32
    %17 = arith.xori %15, %16 : i1
    %18 = arith.andi %17, %14 : i1
    %19 = arith.addi %13, %12 : i32
    %20 = arith.select %18, %19, %13 : i32
    %c0_i32_10 = arith.constant 0 : i32
    %21 = arith.cmpi eq, %arg2, %c0_i32_10 : i32
    %22 = arith.extui %21 : i1 to i32
    %c0_i32_11 = arith.constant 0 : i32
    %23 = arith.cmpi ne, %22, %c0_i32_11 : i32
    scf.if %23 {
      %cst = arith.constant 0.000000e+00 : f32
      %37 = vector.broadcast %cst : f32 to vector<128x128xf32>
      %c0_19 = arith.constant 0 : index
      %c0_20 = arith.constant 0 : index
      %38 = vector.load %arg8[%c0_19, %c0_20] : memref<128x128xf32, #tpu.memory_space<vmem>>, vector<128x128xf32>
      tpu.vector_store %arg8[%c0_19, %c0_20], %37 {strides = array<i32>} : memref<128x128xf32, #tpu.memory_space<vmem>>, vector<128x128xf32>,
    } else {
    }
    %24 = arith.index_cast %arg1 : i32 to index
    %25 = arith.index_cast %arg2 : i32 to index
    %c0 = arith.constant 0 : index
    %c0_12 = arith.constant 0 : index
    %26 = vector.load %arg4[%24, %25, %c0, %c0_12] : memref<1x1x128x128xf32, #tpu.memory_space<vmem>>, vector<1x1x128x128xf32>
    %27 = vector.shape_cast %26 : vector<1x1x128x128xf32> to vector<128x128xf32>
    %c0_i32_13 = arith.constant 0 : i32
    %28 = arith.cmpi eq, %arg0, %c0_i32_13 : i32
    %29 = arith.extui %28 : i1 to i32
    %c0_i32_14 = arith.constant 0 : i32
    %30 = arith.cmpi ne, %29, %c0_i32_14 : i32
    scf.if %30 {
      %c0_19 = arith.constant 0 : index
      %c0_20 = arith.constant 0 : index
      %37 = vector.load %arg8[%c0_19, %c0_20] : memref<128x128xf32, #tpu.memory_space<vmem>>, vector<128x128xf32>
      %c0_21 = arith.constant 0 : index
      %c0_22 = arith.constant 0 : index
      %38 = vector.load %arg3[%c0_21, %c0_22] : memref<128x128xf32, #tpu.memory_space<vmem>>, vector<128x128xf32>
      %cst = arith.constant dense<0.000000e+00> : vector<128x128xf32>
      %39 = tpu.matmul %27, %38, %cst {dimension_numbers = #tpu.dot_dimension_numbers<[1], [0], [0], [1], [0, 0, 1, 1], [], []>} : vector<128x128xf32>, vector<128x128xf32>, vector<128x128xf32> -> vector<128x128xf32>
      %40 = arith.addf %37, %39 : vector<128x128xf32>
      %c0_23 = arith.constant 0 : index
      %c0_24 = arith.constant 0 : index
      %41 = vector.load %arg8[%c0_23, %c0_24] : memref<128x128xf32, #tpu.memory_space<vmem>>, vector<128x128xf32>
      tpu.vector_store %arg8[%c0_23, %c0_24], %40 {strides = array<i32>} : memref<128x128xf32, #tpu.memory_space<vmem>>, vector<128x128xf32>,
    } else {
    }
    %c0_i32_15 = arith.constant 0 : i32
    %31 = arith.cmpi sgt, %arg0, %c0_i32_15 : i32
    %32 = arith.extui %31 : i1 to i32
    %c0_i32_16 = arith.constant 0 : i32
    %33 = arith.cmpi ne, %32, %c0_i32_16 : i32
    scf.if %33 {
      %c128_i32 = arith.constant 128 : i32
      %37 = arith.muli %arg2, %c128_i32 : i32
      %38 = tpu.assume_multiple %37, 128 : i32
      %39 = arith.index_cast %9 : i32 to index
      %40 = arith.index_cast %38 : i32 to index
      %c0_19 = arith.constant 0 : index
      %41 = vector.load %arg7[%39, %40, %c0_19] : memref<2x128x128xf32, #tpu.memory_space<vmem>>, vector<1x128x128xf32>
      %42 = vector.shape_cast %41 : vector<1x128x128xf32> to vector<128x128xf32>
      %c0_20 = arith.constant 0 : index
      %c0_21 = arith.constant 0 : index
      %43 = vector.load %arg8[%c0_20, %c0_21] : memref<128x128xf32, #tpu.memory_space<vmem>>, vector<128x128xf32>
      %cst = arith.constant dense<0.000000e+00> : vector<128x128xf32>
      %44 = tpu.matmul %27, %42, %cst {dimension_numbers = #tpu.dot_dimension_numbers<[1], [0], [0], [1], [0, 0, 1, 1], [], []>} : vector<128x128xf32>, vector<128x128xf32>, vector<128x128xf32> -> vector<128x128xf32>
      %45 = arith.addf %43, %44 : vector<128x128xf32>
      %c0_22 = arith.constant 0 : index
      %c0_23 = arith.constant 0 : index
      %46 = vector.load %arg8[%c0_22, %c0_23] : memref<128x128xf32, #tpu.memory_space<vmem>>, vector<128x128xf32>
      tpu.vector_store %arg8[%c0_22, %c0_23], %45 {strides = array<i32>} : memref<128x128xf32, #tpu.memory_space<vmem>>, vector<128x128xf32>,
    } else {
    }
    %c0_i32_17 = arith.constant 0 : i32
    %34 = arith.cmpi eq, %arg2, %c0_i32_17 : i32
    %35 = arith.extui %34 : i1 to i32
    %c0_i32_18 = arith.constant 0 : i32
    %36 = arith.cmpi ne, %35, %c0_i32_18 : i32
    scf.if %36 {
      %c0_19 = arith.constant 0 : index
      %c0_20 = arith.constant 0 : index
      %37 = vector.load %arg8[%c0_19, %c0_20] : memref<128x128xf32, #tpu.memory_space<vmem>>, vector<128x128xf32>
      %c0_21 = arith.constant 0 : index
      %c0_22 = arith.constant 0 : index
      %38 = vector.load %arg5[%c0_21, %c0_22] : memref<1x128xf32, #tpu.memory_space<vmem>>, vector<1x128xf32>
      %39 = arith.mulf %37, %37 : vector<128x128xf32>
      %40 = vector.broadcast %38 : vector<1x128xf32> to vector<128x128xf32>
      %41 = arith.mulf %39, %40 : vector<128x128xf32>
      %cst = arith.constant dense<0.000000e+00> : vector<128xf32>
      %42 = vector.multi_reduction <add>, %41, %cst [1] : vector<128x128xf32> to vector<128xf32>
      %43 = vector.shape_cast %42 : vector<128xf32> to vector<128x1xf32>
      %cst_23 = arith.constant 0.00999999977 : f32
      %44 = vector.broadcast %cst_23 : f32 to vector<128x1xf32>
      %45 = arith.addf %43, %44 : vector<128x1xf32>
      %46 = math.sqrt %45 : vector<128x1xf32>
      %cst_24 = arith.constant 0.00999999977 : f32
      %47 = vector.broadcast %cst_24 : f32 to vector<128x1xf32>
      %48 = arith.addf %46, %47 : vector<128x1xf32>
      %49 = tpu.reciprocal %48 : vector<128x1xf32> -> vector<128x1xf32>
      %50 = vector.broadcast %49 : vector<128x1xf32> to vector<128x128xf32>
      %51 = arith.mulf %37, %50 : vector<128x128xf32>
      %c128_i32 = arith.constant 128 : i32
      %52 = arith.muli %arg1, %c128_i32 : i32
      %53 = tpu.assume_multiple %52, 128 : i32
      %54 = arith.index_cast %20 : i32 to index
      %55 = arith.index_cast %53 : i32 to index
      %c0_25 = arith.constant 0 : index
      %56 = vector.load %arg7[%54, %55, %c0_25] : memref<2x128x128xf32, #tpu.memory_space<vmem>>, vector<1x128x128xf32>
      %57 = vector.shape_cast %56 : vector<1x128x128xf32> to vector<128x128xf32>
      %58 = vector.shape_cast %51 : vector<128x128xf32> to vector<1x128x128xf32>
      tpu.vector_store %arg7[%54, %55, %c0_25], %58 {strides = array<i32>} : memref<2x128x128xf32, #tpu.memory_space<vmem>>, vector<1x128x128xf32>,
      %c0_26 = arith.constant 0 : index
      %c0_27 = arith.constant 0 : index
      %59 = vector.load %arg6[%c0_26, %c0_27] : memref<128x128xf32, #tpu.memory_space<vmem>>, vector<128x128xf32>
      tpu.vector_store %arg6[%c0_26, %c0_27], %51 {strides = array<i32>} : memref<128x128xf32, #tpu.memory_space<vmem>>, vector<128x128xf32>,
    } else {
    }
    return
  }
  func.func @transform_0(%arg0: i32, %arg1: i32, %arg2: i32) -> (i32, i32) {
    %c0_i32 = arith.constant 0 : i32
    %0 = arith.cmpi eq, %arg0, %c0_i32 : i32
    %c0_i32_0 = arith.constant 0 : i32
    %1 = arith.select %0, %arg2, %c0_i32_0 : i32
    %c0_i32_1 = arith.constant 0 : i32
    %c0_i32_2 = arith.constant 0 : i32
    return %1, %c0_i32_1 : i32, i32
  }
  func.func @transform_1(%arg0: i32, %arg1: i32, %arg2: i32) -> (i32, i32, i32, i32) {
    %c0_i32 = arith.constant 0 : i32
    %c0_i32_0 = arith.constant 0 : i32
    %c0_i32_1 = arith.constant 0 : i32
    %c0_i32_2 = arith.constant 0 : i32
    %c0_i32_3 = arith.constant 0 : i32
    return %c0_i32, %c0_i32_0, %c0_i32_1, %c0_i32_2 : i32, i32, i32, i32
  }
  func.func @transform_2(%arg0: i32, %arg1: i32, %arg2: i32) -> (i32, i32) {
    %c0_i32 = arith.constant 0 : i32
    %c0_i32_0 = arith.constant 0 : i32
    %c0_i32_1 = arith.constant 0 : i32
    return %c0_i32, %c0_i32_0 : i32, i32
  }
  func.func @transform_3(%arg0: i32, %arg1: i32, %arg2: i32) -> (i32, i32) {
    %c0_i32 = arith.constant 0 : i32
    %c0_i32_0 = arith.constant 0 : i32
    return %arg1, %c0_i32 : i32, i32
  }
}

</mosaic_0001>

<llo_original>
// kernel: tpu_custom_call.1
$region0: #{tpu_custom_call.1}
  #allocation0 [shape = 'u32[]', space=smem, size = 0x4, offset = 0x4, fixed_abs, tag = 'smem constant byte address 0x4 - core index']
  #allocation1 [shape = 'u32[144,128]{1,0:T(1,128)}', space=vmem, size = 0x12000, scoped, tag = 'internal scratch']
  #allocation2 [shape = 'f32[2,128,128]{2,1,0:T(8,128)}', space=vmem, size = 0x20000, scoped, tag = 'scratch operand']
  #allocation3 [shape = 'f32[128,128]{1,0:T(8,128)}', space=vmem, size = 0x10000, scoped, tag = 'scratch operand']
  %s0 = inlined_call_operand.hbm [shape: f32[128,128], index: 0, kind: input, shape index: {}]
  %s1 = inlined_call_operand.hbm [shape: f32[1,1,128,128], index: 1, kind: input, shape index: {}]
  %s2 = inlined_call_operand.vmem [shape: f32[1,128], index: 2, kind: input, shape index: {}]
  %s3 = inlined_call_operand.hbm [shape: f32[128,128], index: 3, kind: output, shape index: {}]
  %s4 = sld [smem:[#allocation0]]
  $region69: #{tpu_custom_call.1} parent=0
    _
  %s6 = ssub.s32 1, %s4
  %s7 = scalar_select 0, %s6, %s4
  $region1: #{tpu_custom_call.1} parent=0
    #allocation4 [shape = 'u8[131072]{0}', space=vmem, size = 0x20000, scoped, tag = 'input window, operand 0']
    #allocation5 [shape = 's32[2]{0}', space=sflag, size = 0x8, scoped, tag = 'scoped memory for tpu_custom_call.1']
    #allocation6 [shape = 's32[2]{0}', space=sflag, size = 0x8, scoped, tag = 'scoped memory for tpu_custom_call.1']
    #allocation7 [shape = 'u8[65536]{0}', space=vmem, size = 0x10000, scoped, tag = 'input window, operand 1, single buffered']
    #allocation8 [shape = 's32[1]{0}', space=sflag, size = 0x4, scoped, tag = 'scoped memory for tpu_custom_call.1']
    #allocation9 [shape = 'u8[65536]{0}', space=vmem, size = 0x10000, scoped, tag = 'output window, operand 0, single buffered']
    %8 = vsyncpa [#allocation5], 0
    %s9 = scalar_lea.sflag [#allocation5], 1
    %10 = vsyncpa %s9, 0
    %11 = vsyncpa [#allocation8], 0
    %12 = vsyncpa [#allocation6], 0
    loop: start=0, step=1, limit=4
    $region2: #{tpu_custom_call.1} parent=1 // loop_pre_header
      _
    $region3: #{tpu_custom_call.1} parent=1 // loop_header
      %s14 = sphi 0, %s18
      %p15 = scmp.ge.s32.totalorder %s14, 4
      %s21 = sphi 0, %s40
      %s22 = sphi 0, %s36
      %s23 = sphi 0, %s32
      %s24 = sphi 0, %s21
      %s25 = sphi 0, %s22
      %s26 = sphi 0, %s23
      %s27 = sphi 0, %s24
      %s28 = sphi 0, %s25
      %s29 = sphi 0, %s26
      %s47 = sphi 0, %s49
      %s50 = sphi 0, %s47
      %s51 = sphi 0, %s50
      %s67 = sphi 0, %s51
      %s71 = sphi 0, %s71
      %s73 = sphi 0, %s71
      %s74 = sphi 0, %s73
      %s88 = sphi 0, %s74
      %s92 = sphi 0, %s92
      %s94 = sphi 0, %s92
      %s95 = sphi 0, %s94
      %s109 = sphi 0, %s95
      %s115 = sphi 0, %s117
      %s118 = sphi 0, %s115
      %s119 = sphi 0, %s118
      %s135 = sphi 0, %s119
    $region4: #{tpu_custom_call.1} parent=1 // loop_header_branch
      %17 = sbr.rel (%p15) target = $region8
    $region5: #{tpu_custom_call.1} parent=1 // loop_body
      %s19 = ssub.s32 %s14, 1
      %s20 = ssub.s32 %s14, 2
      %s30 = sadd.s32 1, %s23
      %p31 = scmp.ge.s32.totalorder %s30, 1
      %s32 = scalar_select %p31, 0, %s30
      %s33 = sadd.s32 1, %s22
      %s34 = scalar_select %p31, %s33, %s22
      %p35 = scmp.ge.s32.totalorder %s34, 1
      %s36 = scalar_select %p35, 0, %s34
      %s37 = sadd.s32 1, %s21
      %s38 = scalar_select %p35, %s37, %s21
      %p39 = scmp.ge.s32.totalorder %s38, 2
      %s40 = scalar_select %p39, 0, %s38
      %p41 = scmp.eq.s32.totalorder %s21, 0
      %s42 = scalar_select %p41, %s23, 0
      %p43 = scmp.eq.s32.totalorder %s40, 0
      %s44 = scalar_select %p43, %s32, 0
      %s45 = ssub.s32 %s42, %s44
      %p46 = scmp.eq.s32.totalorder %s45, 0
      %s48 = sadd.s32 %s47, 1
      %s49 = scalar_select %p46, %s47, %s48
      %p52 = pneg %p46
      %p53 = scmp.eq.s32.totalorder %s14, 1
      %p54 = por %p52, %p53
      %p55 = scmp.ne.s32.totalorder %s47, %s50
      %p56 = scmp.eq.s32.totalorder %s14, 0
      %p57 = por %p55, %p56
      %p58 = scmp.ne.s32.totalorder %s47, %s50
      %p59 = scmp.eq.s32.totalorder %s19, 1
      %p60 = por %p58, %p59
      %p61 = scmp.ne.s32.totalorder %s50, %s51
      %p62 = scmp.eq.s32.totalorder %s19, 0
      %p63 = por %p61, %p62
      %p64 = scmp.ne.s32.totalorder %s50, %s51
      %p65 = scmp.eq.s32.totalorder %s20, 1
      %p66 = por %p64, %p65
      %p68 = scmp.ne.s32.totalorder %s51, %s67
      %p69 = scmp.eq.s32.totalorder %s20, 0
      %p70 = por %p68, %p69
      %s72 = sadd.s32 %s71, 1
      %p75 = scmp.eq.s32.totalorder %s14, 1
      %p76 = scmp.ne.s32.totalorder %s71, %s73
      %p77 = scmp.eq.s32.totalorder %s14, 0
      %p78 = por %p76, %p77
      %p79 = scmp.ne.s32.totalorder %s71, %s73
      %p80 = scmp.eq.s32.totalorder %s19, 1
      %p81 = por %p79, %p80
      %p82 = scmp.ne.s32.totalorder %s73, %s74
      %p83 = scmp.eq.s32.totalorder %s19, 0
      %p84 = por %p82, %p83
      %p85 = scmp.ne.s32.totalorder %s73, %s74
      %p86 = scmp.eq.s32.totalorder %s20, 1
      %p87 = por %p85, %p86
      %p89 = scmp.ne.s32.totalorder %s74, %s88
      %p90 = scmp.eq.s32.totalorder %s20, 0
      %p91 = por %p89, %p90
      %s93 = sadd.s32 %s92, 1
      %p96 = scmp.eq.s32.totalorder %s14, 1
      %p97 = scmp.ne.s32.totalorder %s92, %s94
      %p98 = scmp.eq.s32.totalorder %s14, 0
      %p99 = por %p97, %p98
      %p100 = scmp.ne.s32.totalorder %s92, %s94
      %p101 = scmp.eq.s32.totalorder %s19, 1
      %p102 = por %p100, %p101
      %p103 = scmp.ne.s32.totalorder %s94, %s95
      %p104 = scmp.eq.s32.totalorder %s19, 0
      %p105 = por %p103, %p104
      %p106 = scmp.ne.s32.totalorder %s94, %s95
      %p107 = scmp.eq.s32.totalorder %s20, 1
      %p108 = por %p106, %p107
      %p110 = scmp.ne.s32.totalorder %s95, %s109
      %p111 = scmp.eq.s32.totalorder %s20, 0
      %p112 = por %p110, %p111
      %s113 = ssub.s32 %s22, %s36
      %p114 = scmp.eq.s32.totalorder %s113, 0
      %s116 = sadd.s32 %s115, 1
      %s117 = scalar_select %p114, %s115, %s116
      %p120 = pneg %p114
      %p121 = scmp.eq.s32.totalorder %s14, 1
      %p122 = por %p120, %p121
      %p123 = scmp.ne.s32.totalorder %s115, %s118
      %p124 = scmp.eq.s32.totalorder %s14, 0
      %p125 = por %p123, %p124
      %p126 = scmp.ne.s32.totalorder %s115, %s118
      %p127 = scmp.eq.s32.totalorder %s19, 1
      %p128 = por %p126, %p127
      %p129 = scmp.ne.s32.totalorder %s118, %s119
      %p130 = scmp.eq.s32.totalorder %s19, 0
      %p131 = por %p129, %p130
      %p132 = scmp.ne.s32.totalorder %s118, %s119
      %p133 = scmp.eq.s32.totalorder %s20, 1
      %p134 = por %p132, %p133
      %p136 = scmp.ne.s32.totalorder %s119, %s135
      %p137 = scmp.eq.s32.totalorder %s20, 0
      %p138 = por %p136, %p137
      %p139 = scmp.le.s32.totalorder 1, %s14
      %p140 = scmp.lt.s32.totalorder %s14, 3
      %p141 = pnand %p139, %p140
      %p142 = pneg %p141
      // Predicated region
      $region9: #{tpu_custom_call.1} parent=5 // pred_check
        _
      $region10: #{tpu_custom_call.1} parent=5 // pred_check_branch
        %144 = sbr.rel (%p141) target = $region12
      $region11: #{tpu_custom_call.1} parent=5 // pred_region
        %s145 = ssub.s32 %s14, 1
        // Predicated region
        $region13: #{tpu_custom_call.1} parent=11 // pred_check
          %p146 = pneg %p84
        $region14: #{tpu_custom_call.1} parent=11 // pred_check_branch
          %148 = sbr.rel (%p146) target = $region16
        $region15: #{tpu_custom_call.1} parent=11 // pred_region
          %s150 = ssub.s32 2048, 2048
          %151 = vsyncadd [#allocation8], %s150
          %s152 = sshll.u32 [#allocation7], 4
          %s153 = int_to_ptr.vmem [resolvable:$true] %s152
          %158 = dma.hbm_to_vmem [thread:$0]  %s1, 2048, %s153, [#allocation8], 128, 128, 8
        $region16: #{tpu_custom_call.1} parent=11 // pred_fallthru
          _
        // Predicated region
        $region17: #{tpu_custom_call.1} parent=11 // pred_check
          %p159 = pneg %p105
        $region18: #{tpu_custom_call.1} parent=11 // pred_check_branch
          %161 = sbr.rel (%p159) target = $region20
        $region19: #{tpu_custom_call.1} parent=11 // pred_region
          _
        $region20: #{tpu_custom_call.1} parent=11 // pred_fallthru
          _
      $region12: #{tpu_custom_call.1} parent=5 // pred_fallthru
        _
      %p162 = scmp.lt.s32.totalorder %s14, 2
      // Predicated region
      $region21: #{tpu_custom_call.1} parent=5 // pred_check
        %p163 = pneg %p162
      $region22: #{tpu_custom_call.1} parent=5 // pred_check_branch
        %165 = sbr.rel (%p163) target = $region24
      $region23: #{tpu_custom_call.1} parent=5 // pred_region
        // Predicated region
        $region25: #{tpu_custom_call.1} parent=23 // pred_check
          %p166 = pneg %p57
        $region26: #{tpu_custom_call.1} parent=23 // pred_check_branch
          %168 = sbr.rel (%p166) target = $region28
        $region27: #{tpu_custom_call.1} parent=23 // pred_region
          %s169 = sand.u32 %s47, 1
          %s170 = scalar_lea.sflag [#allocation5], %s169
          %s171 = sand.u32 %s47, 1
          %s172 = smul.addr %s171, 128
          %s173 = scalar_lea.vmem [#allocation4], %s172
          %p174 = scmp.eq.s32.totalorder %s21, 0
          %s175 = scalar_select %p174, %s23, 0
          %s176 = smul.u32 16, %s175
          %s178 = ssub.s32 2048, 2048
          %179 = vsyncadd %s170, %s178
          %s180 = smul.addr %s176, 128
          %s181 = scalar_lea.hbm %s0, %s180
          %s182 = sshll.u32 %s173, 4
          %s183 = int_to_ptr.vmem [resolvable:$true] %s182
          %188 = dma.hbm_to_vmem [thread:$0]  %s181, 2048, %s183, %s170, 128, 128, 8
        $region28: #{tpu_custom_call.1} parent=23 // pred_fallthru
          _
      $region24: #{tpu_custom_call.1} parent=5 // pred_fallthru
        _
      %p189 = scmp.le.s32.totalorder 1, %s14
      %p190 = scmp.lt.s32.totalorder %s14, 3
      %p191 = pnand %p189, %p190
      %p192 = pneg %p191
      // Predicated region
      $region29: #{tpu_custom_call.1} parent=5 // pred_check
        _
      $region30: #{tpu_custom_call.1} parent=5 // pred_check_branch
        %194 = sbr.rel (%p191) target = $region32
      $region31: #{tpu_custom_call.1} parent=5 // pred_region
        %s195 = ssub.s32 %s14, 1
        %s196 = sand.u32 %s50, 1
        %s197 = scalar_lea.sflag [#allocation5], %s196
        %s198 = sand.u32 %s50, 1
        %s199 = smul.addr %s198, 128
        %s200 = scalar_lea.vmem [#allocation4], %s199
        // Predicated region
        $region33: #{tpu_custom_call.1} parent=31 // pred_check
          %p201 = pneg %p63
        $region34: #{tpu_custom_call.1} parent=31 // pred_check_branch
          %203 = sbr.rel (%p201) target = $region36
        $region35: #{tpu_custom_call.1} parent=31 // pred_region
          %204 = dma.done %s197, 2048
        $region36: #{tpu_custom_call.1} parent=31 // pred_fallthru
          _
        // Predicated region
        $region37: #{tpu_custom_call.1} parent=31 // pred_check
          %p205 = pneg %p84
        $region38: #{tpu_custom_call.1} parent=31 // pred_check_branch
          %207 = sbr.rel (%p205) target = $region40
        $region39: #{tpu_custom_call.1} parent=31 // pred_region
          %208 = dma.done [#allocation8], 2048
        $region40: #{tpu_custom_call.1} parent=31 // pred_fallthru
          _
        %s209 = sand.u32 %s50, 1
        %s210 = scalar_lea.sflag [#allocation5], %s209
        %s211 = sand.u32 %s50, 1
        %s212 = smul.addr %s211, 128
        %s213 = scalar_lea.vmem [#allocation4], %s212
        %p214 = pneg %p63
        %p215 = pneg %p60
        %p216 = pneg %p84
        %p217 = pneg %p81
        %p218 = pneg %p105
        %p219 = pneg %p102
        %p220 = pneg %p131
        %p221 = pneg %p128
        %p222 = scmp.eq.s32.totalorder %s24, 0
        %s223 = scalar_select %p222, %s26, 0
        %s224 = smul.u32 16, %s223
        %s225 = smul.u32 16, %s25
        %p226 = scmp.lt.s32.totalorder %s24, 0
        %s227 = ssub.s32 0, %s24
        %s228 = scalar_select %p226, %s227, %s24
        %s229 = sand.u32 %s228, 1
        %s230 = ssub.s32 0, %s229
        %s231 = scalar_select %p226, %s230, %s229
        %p232 = scmp.ne.s32.totalorder %s231, 0
        %p233 = scmp.lt.s32.totalorder %s231, 0
        %p234 = pnand %p233, %p232
        %p235 = pneg %p234
        %s236 = sadd.s32 %s231, 2
        %s237 = scalar_select %p235, %s236, %s231
        %s238 = sadd.s32 %s24, 1
        %p239 = scmp.lt.s32.totalorder %s238, 0
        %s240 = ssub.s32 0, %s238
        %s241 = scalar_select %p239, %s240, %s238
        %s242 = sand.u32 %s241, 1
        %s243 = ssub.s32 0, %s242
        %s244 = scalar_select %p239, %s243, %s242
        %p245 = scmp.ne.s32.totalorder %s244, 0
        %p246 = scmp.lt.s32.totalorder %s244, 0
        %p247 = pnand %p246, %p245
        %p248 = pneg %p247
        %s249 = sadd.s32 %s244, 2
        %s250 = scalar_select %p248, %s249, %s244
        %p251 = scmp.eq.s32.totalorder %s26, 0
        // Predicated region
        $region41: #{tpu_custom_call.1} parent=31 // pred_check
          %p252 = pneg %p251
        $region42: #{tpu_custom_call.1} parent=31 // pred_check_branch
          %254 = sbr.rel (%p252) target = $region44
        $region43: #{tpu_custom_call.1} parent=31 // pred_region
          %255 = vst [vmem:[#allocation3] sm:$0xff] 0.0
          %256 = vst [vmem:[#allocation3 + $0x8] sm:$0xff] 0.0
          %257 = vst [vmem:[#allocation3 + $0x10] sm:$0xff] 0.0
          %258 = vst [vmem:[#allocation3 + $0x18] sm:$0xff] 0.0
          %259 = vst [vmem:[#allocation3 + $0x20] sm:$0xff] 0.0
          %260 = vst [vmem:[#allocation3 + $0x28] sm:$0xff] 0.0
          %261 = vst [vmem:[#allocation3 + $0x30] sm:$0xff] 0.0
          %262 = vst [vmem:[#allocation3 + $0x38] sm:$0xff] 0.0
          %263 = vst [vmem:[#allocation3 + $0x40] sm:$0xff] 0.0
          %264 = vst [vmem:[#allocation3 + $0x48] sm:$0xff] 0.0
          %265 = vst [vmem:[#allocation3 + $0x50] sm:$0xff] 0.0
          %266 = vst [vmem:[#allocation3 + $0x58] sm:$0xff] 0.0
          %267 = vst [vmem:[#allocation3 + $0x60] sm:$0xff] 0.0
          %268 = vst [vmem:[#allocation3 + $0x68] sm:$0xff] 0.0
          %269 = vst [vmem:[#allocation3 + $0x70] sm:$0xff] 0.0
          %270 = vst [vmem:[#allocation3 + $0x78] sm:$0xff] 0.0
        $region44: #{tpu_custom_call.1} parent=31 // pred_fallthru
          _
        %s271 = smul.u32 %s26, 128
        %s272 = smul.u32 %s25, 128
        %s273 = sadd.s32 %s271, %s272
        %s274 = scalar_lea.vmem [#allocation7], %s273
        %v275 = vld [vmem:[%s274] sm:$0xff]
        %v276 = vld [vmem:[%s274 + $0x8] sm:$0xff]
        %v277 = vld [vmem:[%s274 + $0x10] sm:$0xff]
        %v278 = vld [vmem:[%s274 + $0x18] sm:$0xff]
        %v279 = vld [vmem:[%s274 + $0x20] sm:$0xff]
        %v280 = vld [vmem:[%s274 + $0x28] sm:$0xff]
        %v281 = vld [vmem:[%s274 + $0x30] sm:$0xff]
        %v282 = vld [vmem:[%s274 + $0x38] sm:$0xff]
        %v283 = vld [vmem:[%s274 + $0x40] sm:$0xff]
        %v284 = vld [vmem:[%s274 + $0x48] sm:$0xff]
        %v285 = vld [vmem:[%s274 + $0x50] sm:$0xff]
        %v286 = vld [vmem:[%s274 + $0x58] sm:$0xff]
        %v287 = vld [vmem:[%s274 + $0x60] sm:$0xff]
        %v288 = vld [vmem:[%s274 + $0x68] sm:$0xff]
        %v289 = vld [vmem:[%s274 + $0x70] sm:$0xff]
        %v290 = vld [vmem:[%s274 + $0x78] sm:$0xff]
        %p291 = scmp.eq.s32.totalorder %s24, 0
        // Predicated region
        $region45: #{tpu_custom_call.1} parent=31 // pred_check
          %p292 = pneg %p291
        $region46: #{tpu_custom_call.1} parent=31 // pred_check_branch
          %294 = sbr.rel (%p292) target = $region48
        $region47: #{tpu_custom_call.1} parent=31 // pred_region
          %v295 = vld [vmem:[#allocation3] sm:$0xff]
          %v296 = vld [vmem:[#allocation3 + $0x8] sm:$0xff]
          %v297 = vld [vmem:[#allocation3 + $0x10] sm:$0xff]
          %v298 = vld [vmem:[#allocation3 + $0x18] sm:$0xff]
          %v299 = vld [vmem:[#allocation3 + $0x20] sm:$0xff]
          %v300 = vld [vmem:[#allocation3 + $0x28] sm:$0xff]
          %v301 = vld [vmem:[#allocation3 + $0x30] sm:$0xff]
          %v302 = vld [vmem:[#allocation3 + $0x38] sm:$0xff]
          %v303 = vld [vmem:[#allocation3 + $0x40] sm:$0xff]
          %v304 = vld [vmem:[#allocation3 + $0x48] sm:$0xff]
          %v305 = vld [vmem:[#allocation3 + $0x50] sm:$0xff]
          %v306 = vld [vmem:[#allocation3 + $0x58] sm:$0xff]
          %v307 = vld [vmem:[#allocation3 + $0x60] sm:$0xff]
          %v308 = vld [vmem:[#allocation3 + $0x68] sm:$0xff]
          %v309 = vld [vmem:[#allocation3 + $0x70] sm:$0xff]
          %v310 = vld [vmem:[#allocation3 + $0x78] sm:$0xff]
          %v311 = vld [vmem:[%s200] sm:$0xff]
          %v312 = vld [vmem:[%s200 + $0x8] sm:$0xff]
          %v313 = vld [vmem:[%s200 + $0x10] sm:$0xff]
          %v314 = vld [vmem:[%s200 + $0x18] sm:$0xff]
          %v315 = vld [vmem:[%s200 + $0x20] sm:$0xff]
          %v316 = vld [vmem:[%s200 + $0x28] sm:$0xff]
          %v317 = vld [vmem:[%s200 + $0x30] sm:$0xff]
          %v318 = vld [vmem:[%s200 + $0x38] sm:$0xff]
          %v319 = vld [vmem:[%s200 + $0x40] sm:$0xff]
          %v320 = vld [vmem:[%s200 + $0x48] sm:$0xff]
          %v321 = vld [vmem:[%s200 + $0x50] sm:$0xff]
          %v322 = vld [vmem:[%s200 + $0x58] sm:$0xff]
          %v323 = vld [vmem:[%s200 + $0x60] sm:$0xff]
          %v324 = vld [vmem:[%s200 + $0x68] sm:$0xff]
          %v325 = vld [vmem:[%s200 + $0x70] sm:$0xff]
          %v326 = vld [vmem:[%s200 + $0x78] sm:$0xff]
          %327 = vmatprep.subr.mxu0 0.0
          %328 = vmatpush1.msra.mxu0 %v311
          %329 = vmatprep.subr.mxu0 0.0
          %330 = vmatpush1.msra.mxu0 %v312
          %331 = vmatprep.subr.mxu0 0.0
          %332 = vmatpush1.msra.mxu0 %v313
          %333 = vmatprep.subr.mxu0 0.0
          %334 = vmatpush1.msra.mxu0 %v314
          %335 = vmatprep.subr.mxu0 0.0
          %336 = vmatpush1.msra.mxu0 %v315
          %337 = vmatprep.subr.mxu0 0.0
          %338 = vmatpush1.msra.mxu0 %v316
          %339 = vmatprep.subr.mxu0 0.0
          %340 = vmatpush1.msra.mxu0 %v317
          %341 = vmatprep.subr.mxu0 0.0
          %342 = vmatpush1.msra.mxu0 %v318
          %343 = vmatprep.subr.mxu0 0.0
          %344 = vmatpush1.msra.mxu0 %v319
          %345 = vmatprep.subr.mxu0 0.0
          %346 = vmatpush1.msra.mxu0 %v320
          %347 = vmatprep.subr.mxu0 0.0
          %348 = vmatpush1.msra.mxu0 %v321
          %349 = vmatprep.subr.mxu0 0.0
          %350 = vmatpush1.msra.mxu0 %v322
          %351 = vmatprep.subr.mxu0 0.0
          %352 = vmatpush1.msra.mxu0 %v323
          %353 = vmatprep.subr.mxu0 0.0
          %354 = vmatpush1.msra.mxu0 %v324
          %355 = vmatprep.subr.mxu0 0.0
          %356 = vmatpush1.msra.mxu0 %v325
          %357 = vmatprep.subr.mxu0 0.0
          %358 = vmatpush1.msra.mxu0 %v326
          %359 = vmatprep.subr.mxu0 0.0
          %360 = vmatpush1.msra.mxu0 0.0
          %361 = vmatprep.subr.mxu0 0.0
          %362 = vmatpush1.msra.mxu0 0.0
          %363 = vmatprep.subr.mxu0 0.0
          %364 = vmatpush1.msra.mxu0 0.0
          %365 = vmatprep.subr.mxu0 0.0
          %366 = vmatpush1.msra.mxu0 0.0
          %367 = vmatprep.subr.mxu0 0.0
          %368 = vmatpush1.msra.mxu0 0.0
          %369 = vmatprep.subr.mxu0 0.0
          %370 = vmatpush1.msra.mxu0 0.0
          %371 = vmatprep.subr.mxu0 0.0
          %372 = vmatpush1.msra.mxu0 0.0
          %373 = vmatprep.subr.mxu0 0.0
          %374 = vmatpush1.msra.mxu0 0.0
          %375 = vmatprep.subr.mxu0 0.0
          %376 = vmatpush1.msra.mxu0 0.0
          %377 = vmatprep.subr.mxu0 0.0
          %378 = vmatpush1.msra.mxu0 0.0
          %379 = vmatprep.subr.mxu0 0.0
          %380 = vmatpush1.msra.mxu0 0.0
          %381 = vmatprep.subr.mxu0 0.0
          %382 = vmatpush1.msra.mxu0 0.0
          %383 = vmatprep.subr.mxu0 0.0
          %384 = vmatpush1.msra.mxu0 0.0
          %385 = vmatprep.subr.mxu0 0.0
          %386 = vmatpush1.msra.mxu0 0.0
          %387 = vmatprep.subr.mxu0 0.0
          %388 = vmatpush1.msra.mxu0 0.0
          %389 = vmatprep.subr.mxu0 0.0
          %390 = vmatpush1.msra.mxu0 0.0
          %391 = vmatprep.mubr.f32.mxu0 0.0
          %392 = vmatmul.mubr.f32.gmra.mrb[0].mxu0 %v275
          %v393 = vpop.f32.mrb[0].mxu0
          %v394 = vadd.f32 0.0, %v393
          %v395 = vpop.f32.mrb[0].mxu0
          %396 = vmatprep.mubr.f32.mxu0 0.0
          %397 = vmatmul.mubr.f32.gmra.mrb[0].mxu0 %v276
          %v398 = vpop.f32.mrb[0].mxu0
          %v399 = vadd.f32 0.0, %v398
          %v400 = vpop.f32.mrb[0].mxu0
          %401 = vmatprep.mubr.f32.mxu0 0.0
          %402 = vmatmul.mubr.f32.gmra.mrb[0].mxu0 %v277
          %v403 = vpop.f32.mrb[0].mxu0
          %v404 = vadd.f32 0.0, %v403
          %v405 = vpop.f32.mrb[0].mxu0
          %406 = vmatprep.mubr.f32.mxu0 0.0
          %407 = vmatmul.mubr.f32.gmra.mrb[0].mxu0 %v278
          %v408 = vpop.f32.mrb[0].mxu0
          %v409 = vadd.f32 0.0, %v408
          %v410 = vpop.f32.mrb[0].mxu0
          %411 = vmatprep.mubr.f32.mxu0 0.0
          %412 = vmatmul.mubr.f32.gmra.mrb[0].mxu0 %v279
          %v413 = vpop.f32.mrb[0].mxu0
          %v414 = vadd.f32 0.0, %v413
          %v415 = vpop.f32.mrb[0].mxu0
          %416 = vmatprep.mubr.f32.mxu0 0.0
          %417 = vmatmul.mubr.f32.gmra.mrb[0].mxu0 %v280
          %v418 = vpop.f32.mrb[0].mxu0
          %v419 = vadd.f32 0.0, %v418
          %v420 = vpop.f32.mrb[0].mxu0
          %421 = vmatprep.mubr.f32.mxu0 0.0
          %422 = vmatmul.mubr.f32.gmra.mrb[0].mxu0 %v281
          %v423 = vpop.f32.mrb[0].mxu0
          %v424 = vadd.f32 0.0, %v423
          %v425 = vpop.f32.mrb[0].mxu0
          %426 = vmatprep.mubr.f32.mxu0 0.0
          %427 = vmatmul.mubr.f32.gmra.mrb[0].mxu0 %v282
          %v428 = vpop.f32.mrb[0].mxu0
          %v429 = vadd.f32 0.0, %v428
          %v430 = vpop.f32.mrb[0].mxu0
          %431 = vmatprep.mubr.f32.mxu0 0.0
          %432 = vmatmul.mubr.f32.gmra.mrb[0].mxu0 %v283
          %v433 = vpop.f32.mrb[0].mxu0
          %v434 = vadd.f32 0.0, %v433
          %v435 = vpop.f32.mrb[0].mxu0
          %436 = vmatprep.mubr.f32.mxu0 0.0
          %437 = vmatmul.mubr.f32.gmra.mrb[0].mxu0 %v284
          %v438 = vpop.f32.mrb[0].mxu0
          %v439 = vadd.f32 0.0, %v438
          %v440 = vpop.f32.mrb[0].mxu0
          %441 = vmatprep.mubr.f32.mxu0 0.0
          %442 = vmatmul.mubr.f32.gmra.mrb[0].mxu0 %v285
          %v443 = vpop.f32.mrb[0].mxu0
          %v444 = vadd.f32 0.0, %v443
          %v445 = vpop.f32.mrb[0].mxu0
          %446 = vmatprep.mubr.f32.mxu0 0.0
          %447 = vmatmul.mubr.f32.gmra.mrb[0].mxu0 %v286
          %v448 = vpop.f32.mrb[0].mxu0
          %v449 = vadd.f32 0.0, %v448
          %v450 = vpop.f32.mrb[0].mxu0
          %451 = vmatprep.mubr.f32.mxu0 0.0
          %452 = vmatmul.mubr.f32.gmra.mrb[0].mxu0 %v287
          %v453 = vpop.f32.mrb[0].mxu0
          %v454 = vadd.f32 0.0, %v453
          %v455 = vpop.f32.mrb[0].mxu0
          %456 = vmatprep.mubr.f32.mxu0 0.0
          %457 = vmatmul.mubr.f32.gmra.mrb[0].mxu0 %v288
          %v458 = vpop.f32.mrb[0].mxu0
          %v459 = vadd.f32 0.0, %v458
          %v460 = vpop.f32.mrb[0].mxu0
          %461 = vmatprep.mubr.f32.mxu0 0.0
          %462 = vmatmul.mubr.f32.gmra.mrb[0].mxu0 %v289
          %v463 = vpop.f32.mrb[0].mxu0
          %v464 = vadd.f32 0.0, %v463
          %v465 = vpop.f32.mrb[0].mxu0
          %466 = vmatprep.mubr.f32.mxu0 0.0
          %467 = vmatmul.mubr.f32.gmra.mrb[0].mxu0 %v290
          %v468 = vpop.f32.mrb[0].mxu0
          %v469 = vadd.f32 0.0, %v468
          %v470 = vpop.f32.mrb[0].mxu0
          %471 = vdwg.mxu0
          %v472 = vadd.f32 %v295, %v394
          %v473 = vadd.f32 %v296, %v399
          %v474 = vadd.f32 %v297, %v404
          %v475 = vadd.f32 %v298, %v409
          %v476 = vadd.f32 %v299, %v414
          %v477 = vadd.f32 %v300, %v419
          %v478 = vadd.f32 %v301, %v424
          %v479 = vadd.f32 %v302, %v429
          %v480 = vadd.f32 %v303, %v434
          %v481 = vadd.f32 %v304, %v439
          %v482 = vadd.f32 %v305, %v444
          %v483 = vadd.f32 %v306, %v449
          %v484 = vadd.f32 %v307, %v454
          %v485 = vadd.f32 %v308, %v459
          %v486 = vadd.f32 %v309, %v464
          %v487 = vadd.f32 %v310, %v469
          %488 = vst [vmem:[#allocation3] sm:$0xff] %v472
          %489 = vst [vmem:[#allocation3 + $0x8] sm:$0xff] %v473
          %490 = vst [vmem:[#allocation3 + $0x10] sm:$0xff] %v474
          %491 = vst [vmem:[#allocation3 + $0x18] sm:$0xff] %v475
          %492 = vst [vmem:[#allocation3 + $0x20] sm:$0xff] %v476
          %493 = vst [vmem:[#allocation3 + $0x28] sm:$0xff] %v477
          %494 = vst [vmem:[#allocation3 + $0x30] sm:$0xff] %v478
          %495 = vst [vmem:[#allocation3 + $0x38] sm:$0xff] %v479
          %496 = vst [vmem:[#allocation3 + $0x40] sm:$0xff] %v480
          %497 = vst [vmem:[#allocation3 + $0x48] sm:$0xff] %v481
          %498 = vst [vmem:[#allocation3 + $0x50] sm:$0xff] %v482
          %499 = vst [vmem:[#allocation3 + $0x58] sm:$0xff] %v483
          %500 = vst [vmem:[#allocation3 + $0x60] sm:$0xff] %v484
          %501 = vst [vmem:[#allocation3 + $0x68] sm:$0xff] %v485
          %502 = vst [vmem:[#allocation3 + $0x70] sm:$0xff] %v486
          %503 = vst [vmem:[#allocation3 + $0x78] sm:$0xff] %v487
        $region48: #{tpu_custom_call.1} parent=31 // pred_fallthru
          _
        %p504 = scmp.gt.s32.totalorder %s24, 0
        // Predicated region
        $region49: #{tpu_custom_call.1} parent=31 // pred_check
          %p505 = pneg %p504
        $region50: #{tpu_custom_call.1} parent=31 // pred_check_branch
          %507 = sbr.rel (%p505) target = $region52
        $region51: #{tpu_custom_call.1} parent=31 // pred_region
          %s508 = smul.u32 %s237, 128
          %s509 = sadd.s32 %s271, %s508
          %s510 = scalar_lea.vmem [#allocation2], %s509
          %v511 = vld [vmem:[%s510] sm:$0xff]
          %v512 = vld [vmem:[%s510 + $0x8] sm:$0xff]
          %v513 = vld [vmem:[%s510 + $0x10] sm:$0xff]
          %v514 = vld [vmem:[%s510 + $0x18] sm:$0xff]
          %v515 = vld [vmem:[%s510 + $0x20] sm:$0xff]
          %v516 = vld [vmem:[%s510 + $0x28] sm:$0xff]
          %v517 = vld [vmem:[%s510 + $0x30] sm:$0xff]
          %v518 = vld [vmem:[%s510 + $0x38] sm:$0xff]
          %v519 = vld [vmem:[%s510 + $0x40] sm:$0xff]
          %v520 = vld [vmem:[%s510 + $0x48] sm:$0xff]
          %v521 = vld [vmem:[%s510 + $0x50] sm:$0xff]
          %v522 = vld [vmem:[%s510 + $0x58] sm:$0xff]
          %v523 = vld [vmem:[%s510 + $0x60] sm:$0xff]
          %v524 = vld [vmem:[%s510 + $0x68] sm:$0xff]
          %v525 = vld [vmem:[%s510 + $0x70] sm:$0xff]
          %v526 = vld [vmem:[%s510 + $0x78] sm:$0xff]
          %v527 = vld [vmem:[#allocation3] sm:$0xff]
          %v528 = vld [vmem:[#allocation3 + $0x8] sm:$0xff]
          %v529 = vld [vmem:[#allocation3 + $0x10] sm:$0xff]
          %v530 = vld [vmem:[#allocation3 + $0x18] sm:$0xff]
          %v531 = vld [vmem:[#allocation3 + $0x20] sm:$0xff]
          %v532 = vld [vmem:[#allocation3 + $0x28] sm:$0xff]
          %v533 = vld [vmem:[#allocation3 + $0x30] sm:$0xff]
          %v534 = vld [vmem:[#allocation3 + $0x38] sm:$0xff]
          %v535 = vld [vmem:[#allocation3 + $0x40] sm:$0xff]
          %v536 = vld [vmem:[#allocation3 + $0x48] sm:$0xff]
          %v537 = vld [vmem:[#allocation3 + $0x50] sm:$0xff]
          %v538 = vld [vmem:[#allocation3 + $0x58] sm:$0xff]
          %v539 = vld [vmem:[#allocation3 + $0x60] sm:$0xff]
          %v540 = vld [vmem:[#allocation3 + $0x68] sm:$0xff]
          %v541 = vld [vmem:[#allocation3 + $0x70] sm:$0xff]
          %v542 = vld [vmem:[#allocation3 + $0x78] sm:$0xff]
          %543 = vmatprep.subr.mxu0 0.0
          %544 = vmatpush1.msra.mxu0 %v511
          %545 = vmatprep.subr.mxu0 0.0
          %546 = vmatpush1.msra.mxu0 %v512
          %547 = vmatprep.subr.mxu0 0.0
          %548 = vmatpush1.msra.mxu0 %v513
          %549 = vmatprep.subr.mxu0 0.0
          %550 = vmatpush1.msra.mxu0 %v514
          %551 = vmatprep.subr.mxu0 0.0
          %552 = vmatpush1.msra.mxu0 %v515
          %553 = vmatprep.subr.mxu0 0.0
          %554 = vmatpush1.msra.mxu0 %v516
          %555 = vmatprep.subr.mxu0 0.0
          %556 = vmatpush1.msra.mxu0 %v517
          %557 = vmatprep.subr.mxu0 0.0
          %558 = vmatpush1.msra.mxu0 %v518
          %559 = vmatprep.subr.mxu0 0.0
          %560 = vmatpush1.msra.mxu0 %v519
          %561 = vmatprep.subr.mxu0 0.0
          %562 = vmatpush1.msra.mxu0 %v520
          %563 = vmatprep.subr.mxu0 0.0
          %564 = vmatpush1.msra.mxu0 %v521
          %565 = vmatprep.subr.mxu0 0.0
          %566 = vmatpush1.msra.mxu0 %v522
          %567 = vmatprep.subr.mxu0 0.0
          %568 = vmatpush1.msra.mxu0 %v523
          %569 = vmatprep.subr.mxu0 0.0
          %570 = vmatpush1.msra.mxu0 %v524
          %571 = vmatprep.subr.mxu0 0.0
          %572 = vmatpush1.msra.mxu0 %v525
          %573 = vmatprep.subr.mxu0 0.0
          %574 = vmatpush1.msra.mxu0 %v526
          %575 = vmatprep.subr.mxu0 0.0
          %576 = vmatpush1.msra.mxu0 0.0
          %577 = vmatprep.subr.mxu0 0.0
          %578 = vmatpush1.msra.mxu0 0.0
          %579 = vmatprep.subr.mxu0 0.0
          %580 = vmatpush1.msra.mxu0 0.0
          %581 = vmatprep.subr.mxu0 0.0
          %582 = vmatpush1.msra.mxu0 0.0
          %583 = vmatprep.subr.mxu0 0.0
          %584 = vmatpush1.msra.mxu0 0.0
          %585 = vmatprep.subr.mxu0 0.0
          %586 = vmatpush1.msra.mxu0 0.0
          %587 = vmatprep.subr.mxu0 0.0
          %588 = vmatpush1.msra.mxu0 0.0
          %589 = vmatprep.subr.mxu0 0.0
          %590 = vmatpush1.msra.mxu0 0.0
          %591 = vmatprep.subr.mxu0 0.0
          %592 = vmatpush1.msra.mxu0 0.0
          %593 = vmatprep.subr.mxu0 0.0
          %594 = vmatpush1.msra.mxu0 0.0
          %595 = vmatprep.subr.mxu0 0.0
          %596 = vmatpush1.msra.mxu0 0.0
          %597 = vmatprep.subr.mxu0 0.0
          %598 = vmatpush1.msra.mxu0 0.0
          %599 = vmatprep.subr.mxu0 0.0
          %600 = vmatpush1.msra.mxu0 0.0
          %601 = vmatprep.subr.mxu0 0.0
          %602 = vmatpush1.msra.mxu0 0.0
          %603 = vmatprep.subr.mxu0 0.0
          %604 = vmatpush1.msra.mxu0 0.0
          %605 = vmatprep.subr.mxu0 0.0
          %606 = vmatpush1.msra.mxu0 0.0
          %607 = vmatprep.mubr.f32.mxu0 0.0
          %608 = vmatmul.mubr.f32.gmra.mrb[0].mxu0 %v275
          %v609 = vpop.f32.mrb[0].mxu0
          %v610 = vadd.f32 0.0, %v609
          %v611 = vpop.f32.mrb[0].mxu0
          %612 = vmatprep.mubr.f32.mxu0 0.0
          %613 = vmatmul.mubr.f32.gmra.mrb[0].mxu0 %v276
          %v614 = vpop.f32.mrb[0].mxu0
          %v615 = vadd.f32 0.0, %v614
          %v616 = vpop.f32.mrb[0].mxu0
          %617 = vmatprep.mubr.f32.mxu0 0.0
          %618 = vmatmul.mubr.f32.gmra.mrb[0].mxu0 %v277
          %v619 = vpop.f32.mrb[0].mxu0
          %v620 = vadd.f32 0.0, %v619
          %v621 = vpop.f32.mrb[0].mxu0
          %622 = vmatprep.mubr.f32.mxu0 0.0
          %623 = vmatmul.mubr.f32.gmra.mrb[0].mxu0 %v278
          %v624 = vpop.f32.mrb[0].mxu0
          %v625 = vadd.f32 0.0, %v624
          %v626 = vpop.f32.mrb[0].mxu0
          %627 = vmatprep.mubr.f32.mxu0 0.0
          %628 = vmatmul.mubr.f32.gmra.mrb[0].mxu0 %v279
          %v629 = vpop.f32.mrb[0].mxu0
          %v630 = vadd.f32 0.0, %v629
          %v631 = vpop.f32.mrb[0].mxu0
          %632 = vmatprep.mubr.f32.mxu0 0.0
          %633 = vmatmul.mubr.f32.gmra.mrb[0].mxu0 %v280
          %v634 = vpop.f32.mrb[0].mxu0
          %v635 = vadd.f32 0.0, %v634
          %v636 = vpop.f32.mrb[0].mxu0
          %637 = vmatprep.mubr.f32.mxu0 0.0
          %638 = vmatmul.mubr.f32.gmra.mrb[0].mxu0 %v281
          %v639 = vpop.f32.mrb[0].mxu0
          %v640 = vadd.f32 0.0, %v639
          %v641 = vpop.f32.mrb[0].mxu0
          %642 = vmatprep.mubr.f32.mxu0 0.0
          %643 = vmatmul.mubr.f32.gmra.mrb[0].mxu0 %v282
          %v644 = vpop.f32.mrb[0].mxu0
          %v645 = vadd.f32 0.0, %v644
          %v646 = vpop.f32.mrb[0].mxu0
          %647 = vmatprep.mubr.f32.mxu0 0.0
          %648 = vmatmul.mubr.f32.gmra.mrb[0].mxu0 %v283
          %v649 = vpop.f32.mrb[0].mxu0
          %v650 = vadd.f32 0.0, %v649
          %v651 = vpop.f32.mrb[0].mxu0
          %652 = vmatprep.mubr.f32.mxu0 0.0
          %653 = vmatmul.mubr.f32.gmra.mrb[0].mxu0 %v284
          %v654 = vpop.f32.mrb[0].mxu0
          %v655 = vadd.f32 0.0, %v654
          %v656 = vpop.f32.mrb[0].mxu0
          %657 = vmatprep.mubr.f32.mxu0 0.0
          %658 = vmatmul.mubr.f32.gmra.mrb[0].mxu0 %v285
          %v659 = vpop.f32.mrb[0].mxu0
          %v660 = vadd.f32 0.0, %v659
          %v661 = vpop.f32.mrb[0].mxu0
          %662 = vmatprep.mubr.f32.mxu0 0.0
          %663 = vmatmul.mubr.f32.gmra.mrb[0].mxu0 %v286
          %v664 = vpop.f32.mrb[0].mxu0
          %v665 = vadd.f32 0.0, %v664
          %v666 = vpop.f32.mrb[0].mxu0
          %667 = vmatprep.mubr.f32.mxu0 0.0
          %668 = vmatmul.mubr.f32.gmra.mrb[0].mxu0 %v287
          %v669 = vpop.f32.mrb[0].mxu0
          %v670 = vadd.f32 0.0, %v669
          %v671 = vpop.f32.mrb[0].mxu0
          %672 = vmatprep.mubr.f32.mxu0 0.0
          %673 = vmatmul.mubr.f32.gmra.mrb[0].mxu0 %v288
          %v674 = vpop.f32.mrb[0].mxu0
          %v675 = vadd.f32 0.0, %v674
          %v676 = vpop.f32.mrb[0].mxu0
          %677 = vmatprep.mubr.f32.mxu0 0.0
          %678 = vmatmul.mubr.f32.gmra.mrb[0].mxu0 %v289
          %v679 = vpop.f32.mrb[0].mxu0
          %v680 = vadd.f32 0.0, %v679
          %v681 = vpop.f32.mrb[0].mxu0
          %682 = vmatprep.mubr.f32.mxu0 0.0
          %683 = vmatmul.mubr.f32.gmra.mrb[0].mxu0 %v290
          %v684 = vpop.f32.mrb[0].mxu0
          %v685 = vadd.f32 0.0, %v684
          %v686 = vpop.f32.mrb[0].mxu0
          %687 = vdwg.mxu0
          %v688 = vadd.f32 %v527, %v610
          %v689 = vadd.f32 %v528, %v615
          %v690 = vadd.f32 %v529, %v620
          %v691 = vadd.f32 %v530, %v625
          %v692 = vadd.f32 %v531, %v630
          %v693 = vadd.f32 %v532, %v635
          %v694 = vadd.f32 %v533, %v640
          %v695 = vadd.f32 %v534, %v645
          %v696 = vadd.f32 %v535, %v650
          %v697 = vadd.f32 %v536, %v655
          %v698 = vadd.f32 %v537, %v660
          %v699 = vadd.f32 %v538, %v665
          %v700 = vadd.f32 %v539, %v670
          %v701 = vadd.f32 %v540, %v675
          %v702 = vadd.f32 %v541, %v680
          %v703 = vadd.f32 %v542, %v685
          %704 = vst [vmem:[#allocation3] sm:$0xff] %v688
          %705 = vst [vmem:[#allocation3 + $0x8] sm:$0xff] %v689
          %706 = vst [vmem:[#allocation3 + $0x10] sm:$0xff] %v690
          %707 = vst [vmem:[#allocation3 + $0x18] sm:$0xff] %v691
          %708 = vst [vmem:[#allocation3 + $0x20] sm:$0xff] %v692
          %709 = vst [vmem:[#allocation3 + $0x28] sm:$0xff] %v693
          %710 = vst [vmem:[#allocation3 + $0x30] sm:$0xff] %v694
          %711 = vst [vmem:[#allocation3 + $0x38] sm:$0xff] %v695
          %712 = vst [vmem:[#allocation3 + $0x40] sm:$0xff] %v696
          %713 = vst [vmem:[#allocation3 + $0x48] sm:$0xff] %v697
          %714 = vst [vmem:[#allocation3 + $0x50] sm:$0xff] %v698
          %715 = vst [vmem:[#allocation3 + $0x58] sm:$0xff] %v699
          %716 = vst [vmem:[#allocation3 + $0x60] sm:$0xff] %v700
          %717 = vst [vmem:[#allocation3 + $0x68] sm:$0xff] %v701
          %718 = vst [vmem:[#allocation3 + $0x70] sm:$0xff] %v702
          %719 = vst [vmem:[#allocation3 + $0x78] sm:$0xff] %v703
        $region52: #{tpu_custom_call.1} parent=31 // pred_fallthru
          _
        // Predicated region
        $region53: #{tpu_custom_call.1} parent=31 // pred_check
          %p720 = pneg %p251
        $region54: #{tpu_custom_call.1} parent=31 // pred_check_branch
          %722 = sbr.rel (%p720) target = $region56
        $region55: #{tpu_custom_call.1} parent=31 // pred_region
          %v723 = vld [vmem:[#allocation3] sm:$0xff]
          %v724 = vld [vmem:[#allocation3 + $0x8] sm:$0xff]
          %v725 = vld [vmem:[#allocation3 + $0x10] sm:$0xff]
          %v726 = vld [vmem:[#allocation3 + $0x18] sm:$0xff]
          %v727 = vld [vmem:[#allocation3 + $0x20] sm:$0xff]
          %v728 = vld [vmem:[#allocation3 + $0x28] sm:$0xff]
          %v729 = vld [vmem:[#allocation3 + $0x30] sm:$0xff]
          %v730 = vld [vmem:[#allocation3 + $0x38] sm:$0xff]
          %v731 = vld [vmem:[#allocation3 + $0x40] sm:$0xff]
          %v732 = vld [vmem:[#allocation3 + $0x48] sm:$0xff]
          %v733 = vld [vmem:[#allocation3 + $0x50] sm:$0xff]
          %v734 = vld [vmem:[#allocation3 + $0x58] sm:$0xff]
          %v735 = vld [vmem:[#allocation3 + $0x60] sm:$0xff]
          %v736 = vld [vmem:[#allocation3 + $0x68] sm:$0xff]
          %v737 = vld [vmem:[#allocation3 + $0x70] sm:$0xff]
          %v738 = vld [vmem:[#allocation3 + $0x78] sm:$0xff]
          %v739 = vld [vmem:[%s2] sm:$0x1]
          %v740 = vmul.f32 %v723, %v723
          %v741 = vmul.f32 %v724, %v724
          %v742 = vmul.f32 %v725, %v725
          %v743 = vmul.f32 %v726, %v726
          %v744 = vmul.f32 %v727, %v727
          %v745 = vmul.f32 %v728, %v728
          %v746 = vmul.f32 %v729, %v729
          %v747 = vmul.f32 %v730, %v730
          %v748 = vmul.f32 %v731, %v731
          %v749 = vmul.f32 %v732, %v732
          %v750 = vmul.f32 %v733, %v733
          %v751 = vmul.f32 %v734, %v734
          %v752 = vmul.f32 %v735, %v735
          %v753 = vmul.f32 %v736, %v736
          %v754 = vmul.f32 %v737, %v737
          %v755 = vmul.f32 %v738, %v738
          %v757 = vlaneseq
          %v758 = vshrl.u32 %v757, 7
          %v759 = vsub.s32 0, %v758
          %v760 = vrot.slane %v739, %v759
          %v762 = vmul.f32 %v740, %v760
          %v763 = vmul.f32 %v741, %v760
          %v764 = vmul.f32 %v742, %v760
          %v765 = vmul.f32 %v743, %v760
          %v766 = vmul.f32 %v744, %v760
          %v767 = vmul.f32 %v745, %v760
          %v768 = vmul.f32 %v746, %v760
          %v769 = vmul.f32 %v747, %v760
          %v770 = vmul.f32 %v748, %v760
          %v771 = vmul.f32 %v749, %v760
          %v772 = vmul.f32 %v750, %v760
          %v773 = vmul.f32 %v751, %v760
          %v774 = vmul.f32 %v752, %v760
          %v775 = vmul.f32 %v753, %v760
          %v776 = vmul.f32 %v754, %v760
          %v777 = vmul.f32 %v755, %v760
          %778 = vadd.xlane.f32.xlu0 %v762
          %v779 = vpop.xlane.xlu0 %778
          %780 = vadd.xlane.f32.xlu0 %v763
          %v781 = vpop.xlane.xlu0 %780
          %782 = vadd.xlane.f32.xlu0 %v764
          %v783 = vpop.xlane.xlu0 %782
          %784 = vadd.xlane.f32.xlu0 %v765
          %v785 = vpop.xlane.xlu0 %784
          %786 = vadd.xlane.f32.xlu0 %v766
          %v787 = vpop.xlane.xlu0 %786
          %788 = vadd.xlane.f32.xlu0 %v767
          %v789 = vpop.xlane.xlu0 %788
          %790 = vadd.xlane.f32.xlu0 %v768
          %v791 = vpop.xlane.xlu0 %790
          %792 = vadd.xlane.f32.xlu0 %v769
          %v793 = vpop.xlane.xlu0 %792
          %794 = vadd.xlane.f32.xlu0 %v770
          %v795 = vpop.xlane.xlu0 %794
          %796 = vadd.xlane.f32.xlu0 %v771
          %v797 = vpop.xlane.xlu0 %796
          %798 = vadd.xlane.f32.xlu0 %v772
          %v799 = vpop.xlane.xlu0 %798
          %800 = vadd.xlane.f32.xlu0 %v773
          %v801 = vpop.xlane.xlu0 %800
          %802 = vadd.xlane.f32.xlu0 %v774
          %v803 = vpop.xlane.xlu0 %802
          %804 = vadd.xlane.f32.xlu0 %v775
          %v805 = vpop.xlane.xlu0 %804
          %806 = vadd.xlane.f32.xlu0 %v776
          %v807 = vpop.xlane.xlu0 %806
          %808 = vadd.xlane.f32.xlu0 %v777
          %v809 = vpop.xlane.xlu0 %808
          %v810 = vadd.f32 %v779, 0.01
          %v811 = vadd.f32 %v781, 0.01
          %v812 = vadd.f32 %v783, 0.01
          %v813 = vadd.f32 %v785, 0.01
          %v814 = vadd.f32 %v787, 0.01
          %v815 = vadd.f32 %v789, 0.01
          %v816 = vadd.f32 %v791, 0.01
          %v817 = vadd.f32 %v793, 0.01
          %v818 = vadd.f32 %v795, 0.01
          %v819 = vadd.f32 %v797, 0.01
          %v820 = vadd.f32 %v799, 0.01
          %v821 = vadd.f32 %v801, 0.01
          %v822 = vadd.f32 %v803, 0.01
          %v823 = vadd.f32 %v805, 0.01
          %v824 = vadd.f32 %v807, 0.01
          %v825 = vadd.f32 %v809, 0.01
          %v826 = vrsqrt.pop %v810
          %v827 = vmul.f32 %v810, %v826
          %vm828 = vcmp.eq.f32.partialorder %v810, inf
          %v829 = vsel %vm828, %v810, %v827
          %vm830 = vcmp.eq.f32.partialorder %v810, 0.0
          %v831 = vand.u32 %v810, 2147483648
          %v832 = vsel %vm830, %v831, %v829
          %v833 = vrsqrt.pop %v811
          %v834 = vmul.f32 %v811, %v833
          %vm835 = vcmp.eq.f32.partialorder %v811, inf
          %v836 = vsel %vm835, %v811, %v834
          %vm837 = vcmp.eq.f32.partialorder %v811, 0.0
          %v838 = vand.u32 %v811, 2147483648
          %v839 = vsel %vm837, %v838, %v836
          %v840 = vrsqrt.pop %v812
          %v841 = vmul.f32 %v812, %v840
          %vm842 = vcmp.eq.f32.partialorder %v812, inf
          %v843 = vsel %vm842, %v812, %v841
          %vm844 = vcmp.eq.f32.partialorder %v812, 0.0
          %v845 = vand.u32 %v812, 2147483648
          %v846 = vsel %vm844, %v845, %v843
          %v847 = vrsqrt.pop %v813
          %v848 = vmul.f32 %v813, %v847
          %vm849 = vcmp.eq.f32.partialorder %v813, inf
          %v850 = vsel %vm849, %v813, %v848
          %vm851 = vcmp.eq.f32.partialorder %v813, 0.0
          %v852 = vand.u32 %v813, 2147483648
          %v853 = vsel %vm851, %v852, %v850
          %v854 = vrsqrt.pop %v814
          %v855 = vmul.f32 %v814, %v854
          %vm856 = vcmp.eq.f32.partialorder %v814, inf
          %v857 = vsel %vm856, %v814, %v855
          %vm858 = vcmp.eq.f32.partialorder %v814, 0.0
          %v859 = vand.u32 %v814, 2147483648
          %v860 = vsel %vm858, %v859, %v857
          %v861 = vrsqrt.pop %v815
          %v862 = vmul.f32 %v815, %v861
          %vm863 = vcmp.eq.f32.partialorder %v815, inf
          %v864 = vsel %vm863, %v815, %v862
          %vm865 = vcmp.eq.f32.partialorder %v815, 0.0
          %v866 = vand.u32 %v815, 2147483648
          %v867 = vsel %vm865, %v866, %v864
          %v868 = vrsqrt.pop %v816
          %v869 = vmul.f32 %v816, %v868
          %vm870 = vcmp.eq.f32.partialorder %v816, inf
          %v871 = vsel %vm870, %v816, %v869
          %vm872 = vcmp.eq.f32.partialorder %v816, 0.0
          %v873 = vand.u32 %v816, 2147483648
          %v874 = vsel %vm872, %v873, %v871
          %v875 = vrsqrt.pop %v817
          %v876 = vmul.f32 %v817, %v875
          %vm877 = vcmp.eq.f32.partialorder %v817, inf
          %v878 = vsel %vm877, %v817, %v876
          %vm879 = vcmp.eq.f32.partialorder %v817, 0.0
          %v880 = vand.u32 %v817, 2147483648
          %v881 = vsel %vm879, %v880, %v878
          %v882 = vrsqrt.pop %v818
          %v883 = vmul.f32 %v818, %v882
          %vm884 = vcmp.eq.f32.partialorder %v818, inf
          %v885 = vsel %vm884, %v818, %v883
          %vm886 = vcmp.eq.f32.partialorder %v818, 0.0
          %v887 = vand.u32 %v818, 2147483648
          %v888 = vsel %vm886, %v887, %v885
          %v889 = vrsqrt.pop %v819
          %v890 = vmul.f32 %v819, %v889
          %vm891 = vcmp.eq.f32.partialorder %v819, inf
          %v892 = vsel %vm891, %v819, %v890
          %vm893 = vcmp.eq.f32.partialorder %v819, 0.0
          %v894 = vand.u32 %v819, 2147483648
          %v895 = vsel %vm893, %v894, %v892
          %v896 = vrsqrt.pop %v820
          %v897 = vmul.f32 %v820, %v896
          %vm898 = vcmp.eq.f32.partialorder %v820, inf
          %v899 = vsel %vm898, %v820, %v897
          %vm900 = vcmp.eq.f32.partialorder %v820, 0.0
          %v901 = vand.u32 %v820, 2147483648
          %v902 = vsel %vm900, %v901, %v899
          %v903 = vrsqrt.pop %v821
          %v904 = vmul.f32 %v821, %v903
          %vm905 = vcmp.eq.f32.partialorder %v821, inf
          %v906 = vsel %vm905, %v821, %v904
          %vm907 = vcmp.eq.f32.partialorder %v821, 0.0
          %v908 = vand.u32 %v821, 2147483648
          %v909 = vsel %vm907, %v908, %v906
          %v910 = vrsqrt.pop %v822
          %v911 = vmul.f32 %v822, %v910
          %vm912 = vcmp.eq.f32.partialorder %v822, inf
          %v913 = vsel %vm912, %v822, %v911
          %vm914 = vcmp.eq.f32.partialorder %v822, 0.0
          %v915 = vand.u32 %v822, 2147483648
          %v916 = vsel %vm914, %v915, %v913
          %v917 = vrsqrt.pop %v823
          %v918 = vmul.f32 %v823, %v917
          %vm919 = vcmp.eq.f32.partialorder %v823, inf
          %v920 = vsel %vm919, %v823, %v918
          %vm921 = vcmp.eq.f32.partialorder %v823, 0.0
          %v922 = vand.u32 %v823, 2147483648
          %v923 = vsel %vm921, %v922, %v920
          %v924 = vrsqrt.pop %v824
          %v925 = vmul.f32 %v824, %v924
          %vm926 = vcmp.eq.f32.partialorder %v824, inf
          %v927 = vsel %vm926, %v824, %v925
          %vm928 = vcmp.eq.f32.partialorder %v824, 0.0
          %v929 = vand.u32 %v824, 2147483648
          %v930 = vsel %vm928, %v929, %v927
          %v931 = vrsqrt.pop %v825
          %v932 = vmul.f32 %v825, %v931
          %vm933 = vcmp.eq.f32.partialorder %v825, inf
          %v934 = vsel %vm933, %v825, %v932
          %vm935 = vcmp.eq.f32.partialorder %v825, 0.0
          %v936 = vand.u32 %v825, 2147483648
          %v937 = vsel %vm935, %v936, %v934
          %v938 = vadd.f32 %v832, 0.01
          %v939 = vadd.f32 %v839, 0.01
          %v940 = vadd.f32 %v846, 0.01
          %v941 = vadd.f32 %v853, 0.01
          %v942 = vadd.f32 %v860, 0.01
          %v943 = vadd.f32 %v867, 0.01
          %v944 = vadd.f32 %v874, 0.01
          %v945 = vadd.f32 %v881, 0.01
          %v946 = vadd.f32 %v888, 0.01
          %v947 = vadd.f32 %v895, 0.01
          %v948 = vadd.f32 %v902, 0.01
          %v949 = vadd.f32 %v909, 0.01
          %v950 = vadd.f32 %v916, 0.01
          %v951 = vadd.f32 %v923, 0.01
          %v952 = vadd.f32 %v930, 0.01
          %v953 = vadd.f32 %v937, 0.01
          %v954 = vrcp.pop %v938
          %v955 = vrcp.pop %v939
          %v956 = vrcp.pop %v940
          %v957 = vrcp.pop %v941
          %v958 = vrcp.pop %v942
          %v959 = vrcp.pop %v943
          %v960 = vrcp.pop %v944
          %v961 = vrcp.pop %v945
          %v962 = vrcp.pop %v946
          %v963 = vrcp.pop %v947
          %v964 = vrcp.pop %v948
          %v965 = vrcp.pop %v949
          %v966 = vrcp.pop %v950
          %v967 = vrcp.pop %v951
          %v968 = vrcp.pop %v952
          %v969 = vrcp.pop %v953
          %v970 = vmul.f32 %v723, %v954
          %v971 = vmul.f32 %v724, %v955
          %v972 = vmul.f32 %v725, %v956
          %v973 = vmul.f32 %v726, %v957
          %v974 = vmul.f32 %v727, %v958
          %v975 = vmul.f32 %v728, %v959
          %v976 = vmul.f32 %v729, %v960
          %v977 = vmul.f32 %v730, %v961
          %v978 = vmul.f32 %v731, %v962
          %v979 = vmul.f32 %v732, %v963
          %v980 = vmul.f32 %v733, %v964
          %v981 = vmul.f32 %v734, %v965
          %v982 = vmul.f32 %v735, %v966
          %v983 = vmul.f32 %v736, %v967
          %v984 = vmul.f32 %v737, %v968
          %v985 = vmul.f32 %v738, %v969
          %s986 = smul.u32 %s250, 128
          %s987 = sadd.s32 %s272, %s986
          %s988 = scalar_lea.vmem [#allocation2], %s987
          %989 = vst [vmem:[%s988] sm:$0xff] %v970
          %990 = vst [vmem:[%s988 + $0x8] sm:$0xff] %v971
          %991 = vst [vmem:[%s988 + $0x10] sm:$0xff] %v972
          %992 = vst [vmem:[%s988 + $0x18] sm:$0xff] %v973
          %993 = vst [vmem:[%s988 + $0x20] sm:$0xff] %v974
          %994 = vst [vmem:[%s988 + $0x28] sm:$0xff] %v975
          %995 = vst [vmem:[%s988 + $0x30] sm:$0xff] %v976
          %996 = vst [vmem:[%s988 + $0x38] sm:$0xff] %v977
          %997 = vst [vmem:[%s988 + $0x40] sm:$0xff] %v978
          %998 = vst [vmem:[%s988 + $0x48] sm:$0xff] %v979
          %999 = vst [vmem:[%s988 + $0x50] sm:$0xff] %v980
          %1000 = vst [vmem:[%s988 + $0x58] sm:$0xff] %v981
          %1001 = vst [vmem:[%s988 + $0x60] sm:$0xff] %v982
          %1002 = vst [vmem:[%s988 + $0x68] sm:$0xff] %v983
          %1003 = vst [vmem:[%s988 + $0x70] sm:$0xff] %v984
          %1004 = vst [vmem:[%s988 + $0x78] sm:$0xff] %v985
          %1005 = vst [vmem:[#allocation9] sm:$0xff] %v970
          %1006 = vst [vmem:[#allocation9 + $0x8] sm:$0xff] %v971
          %1007 = vst [vmem:[#allocation9 + $0x10] sm:$0xff] %v972
          %1008 = vst [vmem:[#allocation9 + $0x18] sm:$0xff] %v973
          %1009 = vst [vmem:[#allocation9 + $0x20] sm:$0xff] %v974
          %1010 = vst [vmem:[#allocation9 + $0x28] sm:$0xff] %v975
          %1011 = vst [vmem:[#allocation9 + $0x30] sm:$0xff] %v976
          %1012 = vst [vmem:[#allocation9 + $0x38] sm:$0xff] %v977
          %1013 = vst [vmem:[#allocation9 + $0x40] sm:$0xff] %v978
          %1014 = vst [vmem:[#allocation9 + $0x48] sm:$0xff] %v979
          %1015 = vst [vmem:[#allocation9 + $0x50] sm:$0xff] %v980
          %1016 = vst [vmem:[#allocation9 + $0x58] sm:$0xff] %v981
          %1017 = vst [vmem:[#allocation9 + $0x60] sm:$0xff] %v982
          %1018 = vst [vmem:[#allocation9 + $0x68] sm:$0xff] %v983
          %1019 = vst [vmem:[#allocation9 + $0x70] sm:$0xff] %v984
          %1020 = vst [vmem:[#allocation9 + $0x78] sm:$0xff] %v985
        $region56: #{tpu_custom_call.1} parent=31 // pred_fallthru
          _
        // Predicated region
        $region57: #{tpu_custom_call.1} parent=31 // pred_check
          %p1021 = pneg %p128
        $region58: #{tpu_custom_call.1} parent=31 // pred_check_branch
          %1023 = sbr.rel (%p1021) target = $region60
        $region59: #{tpu_custom_call.1} parent=31 // pred_region
          %s1024 = smul.u32 16, %s25
          %s1026 = ssub.s32 2048, 2048
          %1027 = vsyncadd [#allocation6], %s1026
          %s1028 = smul.addr %s1024, 128
          %s1029 = scalar_lea.hbm %s3, %s1028
          %s1030 = sshll.u32 [#allocation9], 4
          %s1031 = int_to_ptr.vmem [resolvable:$true] %s1030
          %1036 = dma.vmem_to_hbm [thread:$0]  %s1031, 2048, %s1029, [#allocation6], 128, 128, 8
        $region60: #{tpu_custom_call.1} parent=31 // pred_fallthru
          _
        // Predicated region
        $region61: #{tpu_custom_call.1} parent=31 // pred_check
          %p1037 = pneg %p128
        $region62: #{tpu_custom_call.1} parent=31 // pred_check_branch
          %1039 = sbr.rel (%p1037) target = $region64
        $region63: #{tpu_custom_call.1} parent=31 // pred_region
          %1040 = dma.done [#allocation6], 2048
        $region64: #{tpu_custom_call.1} parent=31 // pred_fallthru
          _
      $region32: #{tpu_custom_call.1} parent=5 // pred_fallthru
        _
      %p1041 = scmp.le.s32.totalorder 2, %s14
      // Predicated region
      $region65: #{tpu_custom_call.1} parent=5 // pred_check
        %p1042 = pneg %p1041
      $region66: #{tpu_custom_call.1} parent=5 // pred_check_branch
        %1044 = sbr.rel (%p1042) target = $region68
      $region67: #{tpu_custom_call.1} parent=5 // pred_region
        %s1045 = ssub.s32 %s14, 2
      $region68: #{tpu_custom_call.1} parent=5 // pred_fallthru
        _
    $region6: #{tpu_custom_call.1} parent=1 // loop_footer
      %s18 = sadd.s32 1, %s14
    $region7: #{tpu_custom_call.1} parent=1 // loop_footer_branch
      %13 = sbr.rel target = $region3
    $region8: #{tpu_custom_call.1} parent=1 // loop_exit
      _
    %1046 = vsyncpa [#allocation5], 1
    %s1047 = scalar_lea.sflag [#allocation5], 1
    %1048 = vsyncpa %s1047, 1
    %1049 = vsyncpa [#allocation8], 1
    %1050 = vsyncpa [#allocation6], 1
    %s1051 = scalar_lea.sflag [#allocation6], 1
    %1052 = vsyncpa %s1051, 1

</llo_original>
